<compile_context>
chip_gen: v7x
topology: tpu7x:2x2x1
jax: 0.10.0
libtpu: 0.0.40
codegen_flags: <defaults>
</compile_context>

<pallas_src>
import jax
import jax.numpy as jnp
from jax import lax
from jax.experimental import pallas as pl
from jax.experimental.pallas import tpu as pltpu

LANES = 128
MIN_TILE_M = 2048   # 2048*128*4 B = 1 MiB / input tile: ~85% of HBM roofline per step
MAX_TILE_M = 4096   # 2 MiB / input tile; 2 inputs x 2 bufs = 8 MiB double-buffered VMEM
NCORES = 2          # leading "parallel" axis: both TCs on v7x; harmless loop on v5e/v6e


def _round_up(x, m):
    return (x + m - 1) // m * m


def _make_focal_kernel(alpha, gamma, n_valid, tile_m, needs_mask):
    alpha = float(alpha)
    g = float(gamma)

    def modulator(one_minus_pt):
        # Integer gamma -> repeated multiplies (VPU slot); float gamma -> pow (EUP).
        if g == int(g) and 0 <= int(g) <= 8:
            gi = int(g)
            if gi == 0:
                return jnp.ones_like(one_minus_pt)
            r = one_minus_pt
            for _ in range(gi - 1):
                r = r * one_minus_pt
            return r
        return one_minus_pt ** g

    def kernel(x_ref, t_ref, o_ref, acc_ref):
        c = pl.program_id(0)
        i = pl.program_id(1)
        n_inner = pl.num_programs(1)

        @pl.when(i == 0)
        def _init():
            acc_ref[...] = jnp.zeros_like(acc_ref)

        x = x_ref[...].astype(jnp.float32)
        t = t_ref[...].astype(jnp.float32)

        if needs_mask:
            # Validity from the *logical* (unclamped) tile position, so clamped
            # duplicate blocks and ragged tails contribute exactly zero.
            # (int32 index math: fine for < 2^31 elements.)
            row_start = (c * n_inner + i) * tile_m
            row = lax.broadcasted_iota(jnp.int32, (tile_m, LANES), 0)
            lane = lax.broadcasted_iota(jnp.int32, (tile_m, LANES), 1)
            valid = (row_start + row) * LANES + lane < n_valid
            # Zero garbage BEFORE transcendentals (edge blocks hold stale data).
            x = jnp.where(valid, x, 0.0)
            t = jnp.where(valid, t, 0.0)

        # Numerically stable binary_cross_entropy_with_logits (no reduction).
        bce = jnp.maximum(x, 0.0) - x * t + jnp.log1p(jnp.exp(-jnp.abs(x)))
        # alpha_table.gather(targets): alpha where t==1 else 1-alpha.
        at = t * alpha + (1.0 - t) * (1.0 - alpha)
        pt = jnp.exp(-bce)
        f = at * modulator(1.0 - pt) * bce

        if needs_mask:
            f = jnp.where(valid, f, 0.0)

        # Partial reduce across vreg rows: relabeling reshape (no data movement)
        # + pure VPU adds into a single-vreg accumulator.
        acc_ref[...] += jnp.sum(f.reshape(tile_m // 8, 8, LANES), axis=0)

        @pl.when(i == n_inner - 1)
        def _fini():
            o_ref[...] = acc_ref[...]

    return kernel


def focal_loss_pallas(inputs, targets, alpha=0.25, gamma=2.0):
    """Focal loss (logits=True, reduce=True): elementwise focal term + global mean."""
    n_valid = int(inputs.size)

    x = inputs.reshape(-1)
    t = targets.reshape(-1)

    # Minimal lane padding, only when total size is not a multiple of 128.
    rem = x.size % LANES
    if rem:
        pad = LANES - rem
        x = jnp.pad(x, (0, pad))
        t = jnp.pad(t, (0, pad))

    m_rows = x.size // LANES
    x2 = x.reshape(m_rows, LANES)
    t2 = t.reshape(m_rows, LANES)

    # Block size: large enough to amortize per-step overhead; split across the
    # parallel core axis only when each core still gets >= MIN_TILE_M rows.
    tile_m = min(MAX_TILE_M, max(MIN_TILE_M, pl.cdiv(m_rows, NCORES)))
    tile_m = _round_up(min(tile_m, m_rows), 8)

    n_tiles = pl.cdiv(m_rows, tile_m)
    ncores = min(NCORES, n_tiles)
    inner = pl.cdiv(n_tiles, ncores)
    last_tile = n_tiles - 1

    needs_mask = (
        (n_valid != m_rows * LANES)        # lane-padded tail
        or (m_rows % tile_m != 0)          # ragged last block
        or (n_tiles % ncores != 0)         # clamped duplicate block on one core
    )

    if n_tiles % ncores == 0:
        in_map = lambda c, i: (c * inner + i, 0)
    else:
        # Clamp so no DMA reads a fully out-of-range block; the kernel's mask
        # (computed from the unclamped index) zeroes the duplicate contribution.
        in_map = lambda c, i: (jnp.minimum(c * inner + i, last_tile), 0)

    in_spec = pl.BlockSpec((tile_m, LANES), in_map)
    out_spec = pl.BlockSpec((8, LANES), lambda c, i: (c, 0))

    kernel = _make_focal_kernel(alpha, gamma, n_valid, tile_m, needs_mask)

    partials = pl.pallas_call(
        kernel,
        out_shape=jax.ShapeDtypeStruct((ncores * 8, LANES), jnp.float32),
        grid_spec=pltpu.PrefetchScalarGridSpec(
            num_scalar_prefetch=0,
            grid=(ncores, inner),
            in_specs=[in_spec, in_spec],
            out_specs=out_spec,
            scratch_shapes=[pltpu.VMEM((8, LANES), jnp.float32)],
        ),
        compiler_params=pltpu.CompilerParams(
            dimension_semantics=("parallel", "arbitrary"),
        ),
    )(x2, t2)

    return jnp.sum(partials) * (1.0 / n_valid)


def focal_loss_ref(inputs, targets, alpha=0.25, gamma=2.0):
    x = inputs.astype(jnp.float32)
    t = targets.astype(jnp.float32)
    bce = jnp.maximum(x, 0.0) - x * t + jnp.log1p(jnp.exp(-jnp.abs(x)))
    at = t * alpha + (1.0 - t) * (1.0 - alpha)
    pt = jnp.exp(-bce)
    return jnp.mean(at * (1.0 - pt) ** gamma * bce)


if __name__ == "__main__":
    key = jax.random.PRNGKey(0)
    k1, k2, k3, k4, k5, k6 = jax.random.split(key, 6)

    # Required small shape (NCHW), matches the module's elementwise forward.
    B, C, H, W = 2, 4, 16, 16
    logits = jax.random.normal(k1, (B, C, H, W), dtype=jnp.float32)
    targets = jax.random.bernoulli(k2, 0.3, (B, C, H, W)).astype(jnp.float32)
    out = jax.block_until_ready(focal_loss_pallas(logits, targets, 0.25, 2.0))
    ref = focal_loss_ref(logits, targets, 0.25, 2.0)
    assert jnp.allclose(out, ref, rtol=1e-4, atol=1e-6), (out, ref)

    # Ragged total size (exercises in-kernel tail masking path).
    logits2 = jax.random.normal(k3, (2, 3, 15, 17), dtype=jnp.float32)
    targets2 = jax.random.bernoulli(k4, 0.5, (2, 3, 15, 17)).astype(jnp.float32)
    out2 = jax.block_until_ready(focal_loss_pallas(logits2, targets2, 0.25, 2.0))
    ref2 = focal_loss_ref(logits2, targets2, 0.25, 2.0)
    assert jnp.allclose(out2, ref2, rtol=1e-4, atol=1e-6), (out2, ref2)

    # Multi-tile size (exercises per-core accumulation + both parallel slots).
    logits3 = jax.random.normal(k5, (8, 16, 64, 64), dtype=jnp.float32)
    targets3 = jax.random.bernoulli(k6, 0.3, (8, 16, 64, 64)).astype(jnp.float32)
    out3 = jax.block_until_ready(focal_loss_pallas(logits3, targets3, 0.25, 2.0))
    ref3 = focal_loss_ref(logits3, targets3, 0.25, 2.0)
    assert jnp.allclose(out3, ref3, rtol=1e-4, atol=1e-6), (out3, ref3)

    print("KERNEL_OK")
</pallas_src>

<mosaic_0001>
module attributes {stable_mosaic.version = 11 : i64} {
  func.func @kernel(%arg0: i32, %arg1: i32, %arg2: memref<16x128xf32, #tpu.memory_space<vmem>>, %arg3: memref<16x128xf32, #tpu.memory_space<vmem>>, %arg4: memref<8x128xf32, #tpu.memory_space<vmem>>, %arg5: memref<8x128xf32, #tpu.memory_space<vmem>>) attributes {dimension_semantics = [#tpu.dimension_semantics<parallel>, #tpu.dimension_semantics<arbitrary>], iteration_bounds = array<i64: 1, 1>, scalar_prefetch = 0 : i64, scratch_operands = 1 : i64, tpu.core_type = #tpu.core_type<tc>, window_params = [{transform_indices = @transform_0, window_bounds = array<i64: 16, 128>}, {transform_indices = @transform_1, window_bounds = array<i64: 16, 128>}, {transform_indices = @transform_2, window_bounds = array<i64: 8, 128>}]} {
    %c0_i32 = arith.constant 0 : i32
    %0 = arith.cmpi eq, %arg1, %c0_i32 : i32
    %1 = arith.extui %0 : i1 to i32
    %c0_i32_0 = arith.constant 0 : i32
    %2 = arith.cmpi ne, %1, %c0_i32_0 : i32
    scf.if %2 {
      %cst_17 = arith.constant 0.000000e+00 : f32
      %38 = vector.broadcast %cst_17 : f32 to vector<8x128xf32>
      %c0_18 = arith.constant 0 : index
      %c0_19 = arith.constant 0 : index
      %39 = vector.load %arg5[%c0_18, %c0_19] : memref<8x128xf32, #tpu.memory_space<vmem>>, vector<8x128xf32>
      tpu.vector_store %arg5[%c0_18, %c0_19], %38 {strides = array<i32>} : memref<8x128xf32, #tpu.memory_space<vmem>>, vector<8x128xf32>,
    } else {
    }
    %c0 = arith.constant 0 : index
    %c0_1 = arith.constant 0 : index
    %3 = vector.load %arg2[%c0, %c0_1] : memref<16x128xf32, #tpu.memory_space<vmem>>, vector<16x128xf32>
    %c0_2 = arith.constant 0 : index
    %c0_3 = arith.constant 0 : index
    %4 = vector.load %arg3[%c0_2, %c0_3] : memref<16x128xf32, #tpu.memory_space<vmem>>, vector<16x128xf32>
    %cst = arith.constant 0.000000e+00 : f32
    %5 = vector.broadcast %cst : f32 to vector<16x128xf32>
    %6 = arith.maximumf %3, %5 : vector<16x128xf32>
    %7 = arith.mulf %3, %4 : vector<16x128xf32>
    %8 = arith.subf %6, %7 : vector<16x128xf32>
    %9 = math.absf %3 : vector<16x128xf32>
    %cst_4 = arith.constant 0.000000e+00 : f32
    %10 = vector.broadcast %cst_4 : f32 to vector<16x128xf32>
    %11 = arith.subf %10, %9 : vector<16x128xf32>
    %12 = math.exp %11 : vector<16x128xf32>
    %13 = math.log1p %12 : vector<16x128xf32>
    %14 = arith.addf %8, %13 : vector<16x128xf32>
    %cst_5 = arith.constant 2.500000e-01 : f32
    %15 = vector.broadcast %cst_5 : f32 to vector<16x128xf32>
    %16 = arith.mulf %4, %15 : vector<16x128xf32>
    %cst_6 = arith.constant 1.000000e+00 : f32
    %17 = vector.broadcast %cst_6 : f32 to vector<16x128xf32>
    %18 = arith.subf %17, %4 : vector<16x128xf32>
    %cst_7 = arith.constant 7.500000e-01 : f32
    %19 = vector.broadcast %cst_7 : f32 to vector<16x128xf32>
    %20 = arith.mulf %18, %19 : vector<16x128xf32>
    %21 = arith.addf %16, %20 : vector<16x128xf32>
    %cst_8 = arith.constant 0.000000e+00 : f32
    %22 = vector.broadcast %cst_8 : f32 to vector<16x128xf32>
    %23 = arith.subf %22, %14 : vector<16x128xf32>
    %24 = math.exp %23 : vector<16x128xf32>
    %cst_9 = arith.constant 1.000000e+00 : f32
    %25 = vector.broadcast %cst_9 : f32 to vector<16x128xf32>
    %26 = arith.subf %25, %24 : vector<16x128xf32>
    %27 = arith.mulf %26, %26 : vector<16x128xf32>
    %28 = arith.mulf %21, %27 : vector<16x128xf32>
    %29 = arith.mulf %28, %14 : vector<16x128xf32>
    %c0_10 = arith.constant 0 : index
    %c0_11 = arith.constant 0 : index
    %30 = vector.load %arg5[%c0_10, %c0_11] : memref<8x128xf32, #tpu.memory_space<vmem>>, vector<8x128xf32>
    %31 = vector.shape_cast %29 : vector<16x128xf32> to vector<2x8x128xf32>
    %cst_12 = arith.constant dense<0.000000e+00> : vector<8x128xf32>
    %32 = vector.multi_reduction <add>, %31, %cst_12 [0] : vector<2x8x128xf32> to vector<8x128xf32>
    %33 = arith.addf %30, %32 : vector<8x128xf32>
    %c0_13 = arith.constant 0 : index
    %c0_14 = arith.constant 0 : index
    %34 = vector.load %arg5[%c0_13, %c0_14] : memref<8x128xf32, #tpu.memory_space<vmem>>, vector<8x128xf32>
    tpu.vector_store %arg5[%c0_13, %c0_14], %33 {strides = array<i32>} : memref<8x128xf32, #tpu.memory_space<vmem>>, vector<8x128xf32>,
    %c0_i32_15 = arith.constant 0 : i32
    %35 = arith.cmpi eq, %arg1, %c0_i32_15 : i32
    %36 = arith.extui %35 : i1 to i32
    %c0_i32_16 = arith.constant 0 : i32
    %37 = arith.cmpi ne, %36, %c0_i32_16 : i32
    scf.if %37 {
      %c0_17 = arith.constant 0 : index
      %c0_18 = arith.constant 0 : index
      %38 = vector.load %arg5[%c0_17, %c0_18] : memref<8x128xf32, #tpu.memory_space<vmem>>, vector<8x128xf32>
      %c0_19 = arith.constant 0 : index
      %c0_20 = arith.constant 0 : index
      %39 = vector.load %arg4[%c0_19, %c0_20] : memref<8x128xf32, #tpu.memory_space<vmem>>, vector<8x128xf32>
      tpu.vector_store %arg4[%c0_19, %c0_20], %38 {strides = array<i32>} : memref<8x128xf32, #tpu.memory_space<vmem>>, vector<8x128xf32>,
    } else {
    }
    return
  }
  func.func @transform_0(%arg0: i32, %arg1: i32) -> (i32, i32) {
    %c1_i32 = arith.constant 1 : i32
    %0 = arith.muli %arg0, %c1_i32 : i32
    %1 = arith.addi %0, %arg1 : i32
    %c0_i32 = arith.constant 0 : i32
    %c0_i32_0 = arith.constant 0 : i32
    return %1, %c0_i32 : i32, i32
  }
  func.func @transform_1(%arg0: i32, %arg1: i32) -> (i32, i32) {
    %c1_i32 = arith.constant 1 : i32
    %0 = arith.muli %arg0, %c1_i32 : i32
    %1 = arith.addi %0, %arg1 : i32
    %c0_i32 = arith.constant 0 : i32
    %c0_i32_0 = arith.constant 0 : i32
    return %1, %c0_i32 : i32, i32
  }
  func.func @transform_2(%arg0: i32, %arg1: i32) -> (i32, i32) {
    %c0_i32 = arith.constant 0 : i32
    %c0_i32_0 = arith.constant 0 : i32
    return %arg0, %c0_i32 : i32, i32
  }
}

</mosaic_0001>

<llo_original>
// kernel: tpu_custom_call.1
$region0: #{tpu_custom_call.1}
  #allocation0 [shape = 'u32[]', space=smem, size = 0x4, offset = 0x4, fixed_abs, tag = 'smem constant byte address 0x4 - core index']
  #allocation1 [shape = 'u32[144,128]{1,0:T(1,128)}', space=vmem, size = 0x12000, scoped, tag = 'internal scratch']
  #allocation2 [shape = 'f32[8,128]{1,0:T(8,128)}', space=vmem, size = 0x1000, scoped, tag = 'scratch operand']
  %s0 = inlined_call_operand.hbm [shape: f32[16,128], index: 0, kind: input, shape index: {}]
  %s1 = inlined_call_operand.hbm [shape: f32[16,128], index: 1, kind: input, shape index: {}]
  %s2 = inlined_call_operand.hbm [shape: f32[8,128], index: 2, kind: output, shape index: {}]
  %s3 = sld [smem:[#allocation0]]
  $region34: #{tpu_custom_call.1} parent=0
    _
  %s5 = ssub.s32 1, %s3
  %s6 = scalar_select 0, %s5, %s3
  $region1: #{tpu_custom_call.1} parent=0
    #allocation3 [shape = 'u8[8192]{0}', space=vmem, size = 0x2000, scoped, tag = 'input window, operand 0, single buffered']
    #allocation4 [shape = 's32[1]{0}', space=sflag, size = 0x4, scoped, tag = 'scoped memory for tpu_custom_call.1']
    #allocation5 [shape = 's32[1]{0}', space=sflag, size = 0x4, scoped, tag = 'scoped memory for tpu_custom_call.1']
    #allocation6 [shape = 'u8[8192]{0}', space=vmem, size = 0x2000, scoped, tag = 'input window, operand 1, single buffered']
    #allocation7 [shape = 's32[1]{0}', space=sflag, size = 0x4, scoped, tag = 'scoped memory for tpu_custom_call.1']
    #allocation8 [shape = 'u8[4096]{0}', space=vmem, size = 0x1000, scoped, tag = 'output window, operand 0, single buffered']
    %7 = vsyncpa [#allocation4], 0
    %8 = vsyncpa [#allocation7], 0
    %9 = vsyncpa [#allocation5], 0
    // Predicated region
    $region2: #{tpu_custom_call.1} parent=1 // pred_check
      _
    $region3: #{tpu_custom_call.1} parent=1 // pred_check_branch
      %11 = sbr.rel (0) target = $region5
    $region4: #{tpu_custom_call.1} parent=1 // pred_region
      %s12 = sadd.s32 0, 0
      %s13 = smul.u32 2, %s12
      %s15 = ssub.s32 256, 256
      %16 = vsyncadd [#allocation4], %s15
      %s17 = smul.addr %s13, 128
      %s18 = scalar_lea.hbm %s0, %s17
      %s19 = sshll.u32 [#allocation3], 4
      %s20 = int_to_ptr.vmem [resolvable:$true] %s19
      %25 = dma.hbm_to_vmem [thread:$0]  %s18, 256, %s20, [#allocation4], 128, 128, 8
    $region5: #{tpu_custom_call.1} parent=1 // pred_fallthru
      _
    // Predicated region
    $region6: #{tpu_custom_call.1} parent=1 // pred_check
      _
    $region7: #{tpu_custom_call.1} parent=1 // pred_check_branch
      %27 = sbr.rel (0) target = $region9
    $region8: #{tpu_custom_call.1} parent=1 // pred_region
      %s28 = sadd.s32 0, 0
      %s29 = smul.u32 2, %s28
      %s31 = ssub.s32 256, 256
      %32 = vsyncadd [#allocation7], %s31
      %s33 = smul.addr %s29, 128
      %s34 = scalar_lea.hbm %s1, %s33
      %s35 = sshll.u32 [#allocation6], 4
      %s36 = int_to_ptr.vmem [resolvable:$true] %s35
      %41 = dma.hbm_to_vmem [thread:$0]  %s34, 256, %s36, [#allocation7], 128, 128, 8
    $region9: #{tpu_custom_call.1} parent=1 // pred_fallthru
      _
    // Predicated region
    $region10: #{tpu_custom_call.1} parent=1 // pred_check
      _
    $region11: #{tpu_custom_call.1} parent=1 // pred_check_branch
      %43 = sbr.rel (0) target = $region13
    $region12: #{tpu_custom_call.1} parent=1 // pred_region
      %44 = dma.done [#allocation4], 256
    $region13: #{tpu_custom_call.1} parent=1 // pred_fallthru
      _
    // Predicated region
    $region14: #{tpu_custom_call.1} parent=1 // pred_check
      _
    $region15: #{tpu_custom_call.1} parent=1 // pred_check_branch
      %46 = sbr.rel (0) target = $region17
    $region16: #{tpu_custom_call.1} parent=1 // pred_region
      %47 = dma.done [#allocation7], 256
    $region17: #{tpu_custom_call.1} parent=1 // pred_fallthru
      _
    %s48 = sadd.s32 0, 0
    %s49 = smul.u32 2, %s48
    %s50 = sadd.s32 0, 0
    %s51 = smul.u32 2, %s50
    %p52 = scmp.eq.s32.totalorder 0, 0
    // Predicated region
    $region18: #{tpu_custom_call.1} parent=1 // pred_check
      %p53 = pneg %p52
    $region19: #{tpu_custom_call.1} parent=1 // pred_check_branch
      %55 = sbr.rel (%p53) target = $region21
    $region20: #{tpu_custom_call.1} parent=1 // pred_region
      %56 = vst [vmem:[#allocation2] sm:$0xff] 0.0
    $region21: #{tpu_custom_call.1} parent=1 // pred_fallthru
      _
    %v57 = vld [vmem:[#allocation3] sm:$0xff]
    %v58 = vld [vmem:[#allocation3 + $0x8] sm:$0xff]
    %v59 = vld [vmem:[#allocation6] sm:$0xff]
    %v60 = vld [vmem:[#allocation6 + $0x8] sm:$0xff]
    %v61 = vmax.f32 %v57, 0.0
    %v62 = vmax.f32 %v58, 0.0
    %v63 = vmul.f32 %v57, %v59
    %v64 = vmul.f32 %v58, %v60
    %v65 = vsub.f32 %v61, %v63
    %v66 = vsub.f32 %v62, %v64
    %v67 = vand.u32 2147483647, %v57
    %v68 = vand.u32 2147483647, %v58
    %v69 = vsub.f32 0.0, %v67
    %v70 = vsub.f32 0.0, %v68
    %v71 = vmul.f32 %v69, 1.442695
    %v72 = vpow.pop %v71
    %v73 = vmul.f32 %v70, 1.442695
    %v74 = vpow.pop %v73
    %v75 = vadd.f32 %v72, 1.0
    %v76 = vlog2.pop %v75
    %v77 = vmul.f32 %v76, 0.6931472
    %v78 = vmul.f32 -0.5, %v72
    %v79 = vadd.f32 %v78, 1.0
    %v80 = vmul.f32 %v79, %v72
    %v81 = vand.u32 2147483647, %v72
    %vm82 = vcmp.lt.f32.partialorder %v81, 0.0004427343
    %v83 = vsel %vm82, %v80, %v77
    %v84 = vadd.f32 %v74, 1.0
    %v85 = vlog2.pop %v84
    %v86 = vmul.f32 %v85, 0.6931472
    %v87 = vmul.f32 -0.5, %v74
    %v88 = vadd.f32 %v87, 1.0
    %v89 = vmul.f32 %v88, %v74
    %v90 = vand.u32 2147483647, %v74
    %vm91 = vcmp.lt.f32.partialorder %v90, 0.0004427343
    %v92 = vsel %vm91, %v89, %v86
    %v93 = vadd.f32 %v65, %v83
    %v94 = vadd.f32 %v66, %v92
    %v95 = vmul.f32 %v59, 0.25
    %v96 = vmul.f32 %v60, 0.25
    %v97 = vsub.f32 1.0, %v59
    %v98 = vsub.f32 1.0, %v60
    %v99 = vmul.f32 %v97, 0.75
    %v100 = vmul.f32 %v98, 0.75
    %v101 = vadd.f32 %v95, %v99
    %v102 = vadd.f32 %v96, %v100
    %v103 = vsub.f32 0.0, %v93
    %v104 = vsub.f32 0.0, %v94
    %v105 = vmul.f32 %v103, 1.442695
    %v106 = vpow.pop %v105
    %v107 = vmul.f32 %v104, 1.442695
    %v108 = vpow.pop %v107
    %v109 = vsub.f32 1.0, %v106
    %v110 = vsub.f32 1.0, %v108
    %v111 = vmul.f32 %v109, %v109
    %v112 = vmul.f32 %v110, %v110
    %v113 = vmul.f32 %v101, %v111
    %v114 = vmul.f32 %v102, %v112
    %v115 = vmul.f32 %v113, %v93
    %v116 = vmul.f32 %v114, %v94
    %v117 = vld [vmem:[#allocation2] sm:$0xff]
    %v118 = vadd.f32 %v115, %v116
    %v119 = vadd.f32 %v117, %v118
    %120 = vst [vmem:[#allocation2] sm:$0xff] %v119
    // Predicated region
    $region22: #{tpu_custom_call.1} parent=1 // pred_check
      %p121 = pneg %p52
    $region23: #{tpu_custom_call.1} parent=1 // pred_check_branch
      %123 = sbr.rel (%p121) target = $region25
    $region24: #{tpu_custom_call.1} parent=1 // pred_region
      %v124 = vld [vmem:[#allocation2] sm:$0xff]
      %125 = vst [vmem:[#allocation8] sm:$0xff] %v124
    $region25: #{tpu_custom_call.1} parent=1 // pred_fallthru
      _
    // Predicated region
    $region26: #{tpu_custom_call.1} parent=1 // pred_check
      _
    $region27: #{tpu_custom_call.1} parent=1 // pred_check_branch
      %127 = sbr.rel (0) target = $region29
    $region28: #{tpu_custom_call.1} parent=1 // pred_region
      %s129 = ssub.s32 128, 128
      %130 = vsyncadd [#allocation5], %s129
      %s132 = sshll.u32 [#allocation8], 4
      %s133 = int_to_ptr.vmem [resolvable:$true] %s132
      %135 = dma.vmem_to_hbm [thread:$0]  %s133, 128, %s2, [#allocation5]
    $region29: #{tpu_custom_call.1} parent=1 // pred_fallthru
      _
    // Predicated region
    $region30: #{tpu_custom_call.1} parent=1 // pred_check
      _
    $region31: #{tpu_custom_call.1} parent=1 // pred_check_branch
      %137 = sbr.rel (0) target = $region33
    $region32: #{tpu_custom_call.1} parent=1 // pred_region
      %138 = dma.done [#allocation5], 128
    $region33: #{tpu_custom_call.1} parent=1 // pred_fallthru
      _
    %139 = vsyncpa [#allocation4], 1
    %140 = vsyncpa [#allocation7], 1
    %141 = vsyncpa [#allocation5], 1

</llo_original>
